<compile_context>
chip_gen: v6e
topology: v6e:2x2x1
jax: 0.10.0
libtpu: 0.0.40
codegen_flags: <defaults>
</compile_context>

<pallas_src>
import jax
import jax.numpy as jnp
from jax.experimental import pallas as pl
from jax.experimental.pallas import tpu as pltpu

LANE = 128
SUBLANE = 8
# 4096 rows * 128 lanes * 4 B = 2 MiB per f32 input tile.
DEFAULT_MAX_ROW_TILE = 4096


def _round_up(x, m):
    return ((x + m - 1) // m) * m


def _row_align(*dtypes):
    """Sublane multiple required by the narrowest streamed dtype."""
    align = SUBLANE
    for dt in dtypes:
        align = max(align, 32 // jnp.dtype(dt).itemsize)  # f32:8 bf16:16 i8:32
    return align


def _make_mse_partial_kernel(rows, row_tile, blocks_per_slice, ragged):
    """Accumulate sum((x-t)^2) into a (1, 8, 128) partial block per slice."""

    def fold(v):
        # (row_tile, 128) -> (1, 8, 128): elementwise vreg adds (pure VPU);
        # the reshape does not cross (8,128) tile boundaries.
        return v.reshape(-1, SUBLANE, LANE).sum(axis=0).reshape(1, SUBLANE, LANE)

    def kernel(x_ref, t_ref, out_ref):
        c = pl.program_id(0)   # "parallel" slice (megacore split on v7x)
        i = pl.program_id(1)   # "arbitrary" reduction step within the slice

        @pl.when(i == 0)
        def _():
            out_ref[...] = jnp.zeros_like(out_ref)

        d = x_ref[...].astype(jnp.float32) - t_ref[...].astype(jnp.float32)
        dd = d * d

        if ragged:
            block_start = (c * blocks_per_slice + i) * row_tile
            overruns = block_start + row_tile > rows

            @pl.when(jnp.logical_not(overruns))
            def _():
                out_ref[...] += fold(dd)

            @pl.when(overruns)
            def _():
                # Mask only on blocks that actually run past `rows`
                # (also zeroes duplicate clamped blocks entirely).
                row_ids = jax.lax.broadcasted_iota(jnp.int32, (row_tile, LANE), 0)
                valid = (block_start + row_ids) < rows
                out_ref[...] += fold(jnp.where(valid, dd, 0.0))
        else:
            out_ref[...] += fold(dd)

    return kernel


def content_loss_forward(x, target, *, max_row_tile=DEFAULT_MAX_ROW_TILE):
    """Pallas ContentLoss.forward.

    Returns (input_passthrough, mse_loss): mse_loss matches
    F.mse_loss(input, target) (reduction='mean'); the input is returned
    unchanged (the PyTorch module is an identity that stashes self.loss).
    """
    assert x.shape == target.shape, "input/target shape mismatch"
    n_elems = x.size
    assert n_elems > 0

    align = _row_align(x.dtype, target.dtype)

    x_flat = x.reshape(-1)
    t_flat = target.reshape(-1)

    padded = max(_round_up(n_elems, LANE), align * LANE)
    if padded != n_elems:
        # TODO(synk): only taken when n_elems isn't a multiple of 128 (or the
        # tensor is tiny, < align*128 elements); pads both flattened arrays
        # once (one HBM copy each). Typical conv feature maps are zero-copy.
        pad = padded - n_elems
        x_flat = jnp.pad(x_flat, (0, pad))
        t_flat = jnp.pad(t_flat, (0, pad))

    rows = padded // LANE
    x2d = x_flat.reshape(rows, LANE)
    t2d = t_flat.reshape(rows, LANE)

    # Row tile: a multiple of `align`, never larger than the array, so every
    # block starts in-bounds; only trailing blocks may overrun (masked).
    row_tile = max(align, (min(max_row_tile, rows) // align) * align)
    total_blocks = pl.cdiv(rows, row_tile)

    # Two slices -> on v7x each TensorCore streams half the rows into its own
    # partial-sum block; on 1-TC chips the outer axis is just a length-2 loop.
    num_slices = 2 if total_blocks >= 2 else 1
    blocks_per_slice = pl.cdiv(total_blocks, num_slices)
    ragged = (num_slices * blocks_per_slice * row_tile) != rows

    def in_map(c, i):
        # Clamp so a duplicate trailing block (odd block count split over two
        # slices) still reads in-bounds; its contribution is masked to zero.
        return (jnp.minimum(c * blocks_per_slice + i, total_blocks - 1), 0)

    kernel = _make_mse_partial_kernel(rows, row_tile, blocks_per_slice, ragged)

    partials = pl.pallas_call(
        kernel,
        out_shape=jax.ShapeDtypeStruct((num_slices, SUBLANE, LANE), jnp.float32),
        grid_spec=pltpu.PrefetchScalarGridSpec(
            num_scalar_prefetch=0,
            grid=(num_slices, blocks_per_slice),
            in_specs=[
                pl.BlockSpec((row_tile, LANE), in_map),
                pl.BlockSpec((row_tile, LANE), in_map),
            ],
            out_specs=pl.BlockSpec((1, SUBLANE, LANE), lambda c, i: (c, 0, 0)),
        ),
        compiler_params=pltpu.CompilerParams(
            # Outer axis: independent partial sums -> "parallel" (megacore).
            # Inner axis: carried accumulator -> must stay "arbitrary".
            dimension_semantics=("parallel", "arbitrary"),
        ),
    )(x2d, t2d)

    # Single cross-lane reduce + normalization by the ORIGINAL element count.
    loss = jnp.sum(partials) / jnp.float32(n_elems)
    # The module returns its input unchanged (identity pass-through).
    return x, loss


def _ref_mse(x, target):
    d = x.astype(jnp.float32) - target.astype(jnp.float32)
    return jnp.mean(d * d)


def _check(shape, key, dtype=jnp.float32, **kwargs):
    kx, kt = jax.random.split(key)
    x = jax.random.normal(kx, shape, dtype=jnp.float32).astype(dtype)
    # "target" corresponds to target.detach() in __init__ — a fixed tensor.
    target = jax.random.normal(kt, shape, dtype=jnp.float32).astype(dtype)

    out, loss = content_loss_forward(x, target, **kwargs)
    out = jax.block_until_ready(out)
    loss = jax.block_until_ready(loss)

    ref_loss = _ref_mse(x, target)
    assert out.shape == x.shape and out.dtype == x.dtype
    assert jnp.allclose(out, x), "pass-through output mismatch"
    assert jnp.allclose(loss, ref_loss, rtol=1e-5, atol=1e-6), (
        f"loss mismatch on {shape} {jnp.dtype(dtype).name}: {loss} vs {ref_loss}"
    )


if __name__ == "__main__":
    key = jax.random.PRNGKey(0)
    keys = jax.random.split(key, 5)

    # Small NCHW conv-feature shapes consistent with a content loss.
    _check((2, 4, 16, 16), keys[0])                      # single block, no mask
    _check((4, 8, 16, 32), keys[1], max_row_tile=32)     # 2 slices x 2 steps
    _check((2, 3, 16, 16), keys[2], max_row_tile=8)      # ragged rows (mask path)
    _check((2, 3, 5, 7), keys[3])                        # n % 128 != 0 (pad path)
    _check((2, 4, 16, 16), keys[4], dtype=jnp.bfloat16)  # native bf16 streaming

    print("KERNEL_OK")
</pallas_src>

<mosaic_0001>
module attributes {stable_mosaic.version = 11 : i64} {
  func.func @kernel(%arg0: i32, %arg1: i32, %arg2: memref<16x128xf32, #tpu.memory_space<vmem>>, %arg3: memref<16x128xf32, #tpu.memory_space<vmem>>, %arg4: memref<1x8x128xf32, #tpu.memory_space<vmem>>) attributes {dimension_semantics = [#tpu.dimension_semantics<parallel>, #tpu.dimension_semantics<arbitrary>], iteration_bounds = array<i64: 1, 1>, scalar_prefetch = 0 : i64, scratch_operands = 0 : i64, tpu.core_type = #tpu.core_type<tc>, window_params = [{transform_indices = @transform_0, window_bounds = array<i64: 16, 128>}, {transform_indices = @transform_1, window_bounds = array<i64: 16, 128>}, {transform_indices = @transform_2, window_bounds = array<i64: 1, 8, 128>}]} {
    %c0_i32 = arith.constant 0 : i32
    %0 = arith.cmpi eq, %arg1, %c0_i32 : i32
    %1 = arith.extui %0 : i1 to i32
    %c0_i32_0 = arith.constant 0 : i32
    %2 = arith.cmpi ne, %1, %c0_i32_0 : i32
    scf.if %2 {
      %cst_10 = arith.constant 0.000000e+00 : f32
      %13 = vector.broadcast %cst_10 : f32 to vector<1x8x128xf32>
      %c0_11 = arith.constant 0 : index
      %c0_12 = arith.constant 0 : index
      %c0_13 = arith.constant 0 : index
      %14 = vector.load %arg4[%c0_11, %c0_12, %c0_13] : memref<1x8x128xf32, #tpu.memory_space<vmem>>, vector<1x8x128xf32>
      tpu.vector_store %arg4[%c0_11, %c0_12, %c0_13], %13 {strides = array<i32>} : memref<1x8x128xf32, #tpu.memory_space<vmem>>, vector<1x8x128xf32>,
    } else {
    }
    %c0 = arith.constant 0 : index
    %c0_1 = arith.constant 0 : index
    %3 = vector.load %arg2[%c0, %c0_1] : memref<16x128xf32, #tpu.memory_space<vmem>>, vector<16x128xf32>
    %c0_2 = arith.constant 0 : index
    %c0_3 = arith.constant 0 : index
    %4 = vector.load %arg3[%c0_2, %c0_3] : memref<16x128xf32, #tpu.memory_space<vmem>>, vector<16x128xf32>
    %5 = arith.subf %3, %4 : vector<16x128xf32>
    %6 = arith.mulf %5, %5 : vector<16x128xf32>
    %c0_4 = arith.constant 0 : index
    %c0_5 = arith.constant 0 : index
    %c0_6 = arith.constant 0 : index
    %7 = vector.load %arg4[%c0_4, %c0_5, %c0_6] : memref<1x8x128xf32, #tpu.memory_space<vmem>>, vector<1x8x128xf32>
    %8 = vector.shape_cast %6 : vector<16x128xf32> to vector<2x8x128xf32>
    %cst = arith.constant dense<0.000000e+00> : vector<8x128xf32>
    %9 = vector.multi_reduction <add>, %8, %cst [0] : vector<2x8x128xf32> to vector<8x128xf32>
    %10 = vector.shape_cast %9 : vector<8x128xf32> to vector<1x8x128xf32>
    %11 = arith.addf %7, %10 : vector<1x8x128xf32>
    %c0_7 = arith.constant 0 : index
    %c0_8 = arith.constant 0 : index
    %c0_9 = arith.constant 0 : index
    %12 = vector.load %arg4[%c0_7, %c0_8, %c0_9] : memref<1x8x128xf32, #tpu.memory_space<vmem>>, vector<1x8x128xf32>
    tpu.vector_store %arg4[%c0_7, %c0_8, %c0_9], %11 {strides = array<i32>} : memref<1x8x128xf32, #tpu.memory_space<vmem>>, vector<1x8x128xf32>,
    return
  }
  func.func @transform_0(%arg0: i32, %arg1: i32) -> (i32, i32) {
    %c1_i32 = arith.constant 1 : i32
    %0 = arith.muli %arg0, %c1_i32 : i32
    %1 = arith.addi %0, %arg1 : i32
    %c0_i32 = arith.constant 0 : i32
    %2 = arith.minsi %1, %c0_i32 : i32
    %c0_i32_0 = arith.constant 0 : i32
    %c0_i32_1 = arith.constant 0 : i32
    return %2, %c0_i32_0 : i32, i32
  }
  func.func @transform_1(%arg0: i32, %arg1: i32) -> (i32, i32) {
    %c1_i32 = arith.constant 1 : i32
    %0 = arith.muli %arg0, %c1_i32 : i32
    %1 = arith.addi %0, %arg1 : i32
    %c0_i32 = arith.constant 0 : i32
    %2 = arith.minsi %1, %c0_i32 : i32
    %c0_i32_0 = arith.constant 0 : i32
    %c0_i32_1 = arith.constant 0 : i32
    return %2, %c0_i32_0 : i32, i32
  }
  func.func @transform_2(%arg0: i32, %arg1: i32) -> (i32, i32, i32) {
    %c0_i32 = arith.constant 0 : i32
    %c0_i32_0 = arith.constant 0 : i32
    %c0_i32_1 = arith.constant 0 : i32
    return %arg0, %c0_i32, %c0_i32_0 : i32, i32, i32
  }
}

</mosaic_0001>

<llo_original>
// kernel: tpu_custom_call.1
$region0: #{tpu_custom_call.1}
  #allocation0 [shape = 'u32[]', space=smem, size = 0x4, offset = 0x4, fixed_abs, tag = 'smem constant byte address 0x4 - core index']
  #allocation1 [shape = 'u32[144,128]{1,0:T(1,128)}', space=vmem, size = 0x12000, scoped, tag = 'internal scratch']
  %s0 = inlined_call_operand.hbm [shape: f32[16,128], index: 0, kind: input, shape index: {}]
  %s1 = inlined_call_operand.hbm [shape: f32[16,128], index: 1, kind: input, shape index: {}]
  %s2 = inlined_call_operand.hbm [shape: f32[1,8,128], index: 2, kind: output, shape index: {}]
  %s3 = sld [smem:[#allocation0]]
  $region30: #{tpu_custom_call.1} parent=0
    _
  %s5 = ssub.s32 1, %s3
  %s6 = scalar_select 0, %s5, %s3
  $region1: #{tpu_custom_call.1} parent=0
    #allocation2 [shape = 'u8[8192]{0}', space=vmem, size = 0x2000, scoped, tag = 'input window, operand 0, single buffered']
    #allocation3 [shape = 's32[1]{0}', space=sflag, size = 0x4, scoped, tag = 'scoped memory for tpu_custom_call.1']
    #allocation4 [shape = 's32[1]{0}', space=sflag, size = 0x4, scoped, tag = 'scoped memory for tpu_custom_call.1']
    #allocation5 [shape = 'u8[8192]{0}', space=vmem, size = 0x2000, scoped, tag = 'input window, operand 1, single buffered']
    #allocation6 [shape = 's32[1]{0}', space=sflag, size = 0x4, scoped, tag = 'scoped memory for tpu_custom_call.1']
    #allocation7 [shape = 'u8[4096]{0}', space=vmem, size = 0x1000, scoped, tag = 'output window, operand 0, single buffered']
    %7 = vsyncpa [#allocation3], 0
    %8 = vsyncpa [#allocation6], 0
    %9 = vsyncpa [#allocation4], 0
    // Predicated region
    $region2: #{tpu_custom_call.1} parent=1 // pred_check
      _
    $region3: #{tpu_custom_call.1} parent=1 // pred_check_branch
      %11 = sbr.rel (0) target = $region5
    $region4: #{tpu_custom_call.1} parent=1 // pred_region
      %s12 = sadd.s32 0, 0
      %p13 = scmp.lt.s32.totalorder %s12, 0
      %s14 = scalar_select %p13, %s12, 0
      %s15 = smul.u32 2, %s14
      %s17 = ssub.s32 256, 256
      %18 = vsyncadd [#allocation3], %s17
      %s19 = smul.addr %s15, 128
      %s20 = scalar_lea.hbm %s0, %s19
      %s21 = sshll.u32 [#allocation2], 4
      %s22 = int_to_ptr.vmem [resolvable:$true] %s21
      %27 = dma.hbm_to_vmem [thread:$0]  %s20, 256, %s22, [#allocation3], 128, 128, 8
    $region5: #{tpu_custom_call.1} parent=1 // pred_fallthru
      _
    // Predicated region
    $region6: #{tpu_custom_call.1} parent=1 // pred_check
      _
    $region7: #{tpu_custom_call.1} parent=1 // pred_check_branch
      %29 = sbr.rel (0) target = $region9
    $region8: #{tpu_custom_call.1} parent=1 // pred_region
      %s30 = sadd.s32 0, 0
      %p31 = scmp.lt.s32.totalorder %s30, 0
      %s32 = scalar_select %p31, %s30, 0
      %s33 = smul.u32 2, %s32
      %s35 = ssub.s32 256, 256
      %36 = vsyncadd [#allocation6], %s35
      %s37 = smul.addr %s33, 128
      %s38 = scalar_lea.hbm %s1, %s37
      %s39 = sshll.u32 [#allocation5], 4
      %s40 = int_to_ptr.vmem [resolvable:$true] %s39
      %45 = dma.hbm_to_vmem [thread:$0]  %s38, 256, %s40, [#allocation6], 128, 128, 8
    $region9: #{tpu_custom_call.1} parent=1 // pred_fallthru
      _
    // Predicated region
    $region10: #{tpu_custom_call.1} parent=1 // pred_check
      _
    $region11: #{tpu_custom_call.1} parent=1 // pred_check_branch
      %47 = sbr.rel (0) target = $region13
    $region12: #{tpu_custom_call.1} parent=1 // pred_region
      %48 = dma.done [#allocation3], 256
    $region13: #{tpu_custom_call.1} parent=1 // pred_fallthru
      _
    // Predicated region
    $region14: #{tpu_custom_call.1} parent=1 // pred_check
      _
    $region15: #{tpu_custom_call.1} parent=1 // pred_check_branch
      %50 = sbr.rel (0) target = $region17
    $region16: #{tpu_custom_call.1} parent=1 // pred_region
      %51 = dma.done [#allocation6], 256
    $region17: #{tpu_custom_call.1} parent=1 // pred_fallthru
      _
    %s52 = sadd.s32 0, 0
    %p53 = scmp.lt.s32.totalorder %s52, 0
    %s54 = scalar_select %p53, %s52, 0
    %s55 = smul.u32 2, %s54
    %s56 = sadd.s32 0, 0
    %p57 = scmp.lt.s32.totalorder %s56, 0
    %s58 = scalar_select %p57, %s56, 0
    %s59 = smul.u32 2, %s58
    %p60 = scmp.eq.s32.totalorder 0, 0
    // Predicated region
    $region18: #{tpu_custom_call.1} parent=1 // pred_check
      %p61 = pneg %p60
    $region19: #{tpu_custom_call.1} parent=1 // pred_check_branch
      %63 = sbr.rel (%p61) target = $region21
    $region20: #{tpu_custom_call.1} parent=1 // pred_region
      %64 = vst [vmem:[#allocation7] sm:$0xff] 0.0
    $region21: #{tpu_custom_call.1} parent=1 // pred_fallthru
      _
    %v65 = vld [vmem:[#allocation2] sm:$0xff]
    %v66 = vld [vmem:[#allocation2 + $0x8] sm:$0xff]
    %v67 = vld [vmem:[#allocation5] sm:$0xff]
    %v68 = vld [vmem:[#allocation5 + $0x8] sm:$0xff]
    %v69 = vsub.f32 %v65, %v67
    %v70 = vsub.f32 %v66, %v68
    %v71 = vmul.f32 %v69, %v69
    %v72 = vmul.f32 %v70, %v70
    %v73 = vld [vmem:[#allocation7] sm:$0xff]
    %v74 = vadd.f32 %v71, %v72
    %v75 = vadd.f32 %v73, %v74
    %76 = vst [vmem:[#allocation7] sm:$0xff] %v75
    // Predicated region
    $region22: #{tpu_custom_call.1} parent=1 // pred_check
      _
    $region23: #{tpu_custom_call.1} parent=1 // pred_check_branch
      %78 = sbr.rel (0) target = $region25
    $region24: #{tpu_custom_call.1} parent=1 // pred_region
      %s80 = ssub.s32 128, 128
      %81 = vsyncadd [#allocation4], %s80
      %s83 = sshll.u32 [#allocation7], 4
      %s84 = int_to_ptr.vmem [resolvable:$true] %s83
      %86 = dma.vmem_to_hbm [thread:$0]  %s84, 128, %s2, [#allocation4]
    $region25: #{tpu_custom_call.1} parent=1 // pred_fallthru
      _
    // Predicated region
    $region26: #{tpu_custom_call.1} parent=1 // pred_check
      _
    $region27: #{tpu_custom_call.1} parent=1 // pred_check_branch
      %88 = sbr.rel (0) target = $region29
    $region28: #{tpu_custom_call.1} parent=1 // pred_region
      %89 = dma.done [#allocation4], 128
    $region29: #{tpu_custom_call.1} parent=1 // pred_fallthru
      _
    %90 = vsyncpa [#allocation3], 1
    %91 = vsyncpa [#allocation6], 1
    %92 = vsyncpa [#allocation4], 1

</llo_original>
